<compile_context>
chip_gen: v7x
topology: tpu7x:2x2x1
jax: 0.10.0
libtpu: 0.0.40
codegen_flags: <defaults>
</compile_context>

<pallas_src>
import functools

import jax
import jax.numpy as jnp
from jax.experimental import pallas as pl
from jax.experimental.pallas import tpu as pltpu


def mlp_kernel(x_ref, w1_ref, b1_ref, w2_ref, b2_ref, w3_ref, b3_ref, out_ref):
    mxu_dtype = w1_ref.dtype  # bf16 in perf mode, f32 in exact mode
    # Layer 1: (tb, D) @ (D, 128) + (1, 128) -> sigmoid (f32 accumulate/math).
    x = x_ref[...].astype(mxu_dtype)
    h1 = jnp.dot(x, w1_ref[...], preferred_element_type=jnp.float32)
    h1 = jax.nn.sigmoid(h1 + b1_ref[...])
    # Layer 2: (tb, 128) @ (128, 256) + (1, 256) -> sigmoid.
    h2 = jnp.dot(h1.astype(mxu_dtype), w2_ref[...],
                 preferred_element_type=jnp.float32)
    h2 = jax.nn.sigmoid(h2 + b2_ref[...])
    # Layer 3 (output columns lane-padded to a multiple of 128): no activation.
    h3 = jnp.dot(h2.astype(mxu_dtype), w3_ref[...],
                 preferred_element_type=jnp.float32)
    out_ref[...] = (h3 + b3_ref[...]).astype(out_ref.dtype)


def _round_up(x, m):
    return ((x + m - 1) // m) * m


def _cdiv(a, b):
    return -(-a // b)


def _choose_tile(batch, tile_b):
    """Sublane-aligned batch tile; prefer an even step count for v7x megacore."""
    tb = min(tile_b, _round_up(batch, 8))
    tb = max(8, _round_up(tb, 8))
    steps = _cdiv(batch, tb)
    if steps > 1 and steps % 2 == 1:
        tb_even = _round_up(_cdiv(batch, steps + 1), 8)
        if tb_even >= 8 and _cdiv(batch, tb_even) % 2 == 0:
            tb = tb_even
    return tb


def prepare_params(params, *, mxu_dtype=jnp.bfloat16):
    """One-time prep: pad fc3 to a 128-lane multiple, cast weights to MXU dtype.

    Biases stay f32 (bias add / sigmoid run in f32 inside the kernel).
    """
    w1, b1, w2, b2, w3, b3 = (params["w1"], params["b1"], params["w2"],
                              params["b2"], params["w3"], params["b3"])
    n_classes = w3.shape[1]
    n_pad = max(128, _round_up(n_classes, 128))
    if n_pad != n_classes:
        w3 = jnp.zeros((w3.shape[0], n_pad), w3.dtype).at[:, :n_classes].set(w3)
        b3 = jnp.zeros((1, n_pad), b3.dtype).at[:, :n_classes].set(b3)
    return {
        "w1": w1.astype(mxu_dtype), "b1": b1.astype(jnp.float32),
        "w2": w2.astype(mxu_dtype), "b2": b2.astype(jnp.float32),
        "w3": w3.astype(mxu_dtype), "b3": b3.astype(jnp.float32),
    }


@functools.partial(jax.jit, static_argnames=("n_classes", "tile_b"))
def linear_classifier_forward(x, kparams, *, n_classes, tile_b=512):
    """x: (B, input_dims) f32; kparams: output of prepare_params()."""
    w1, b1, w2, b2, w3, b3 = (kparams["w1"], kparams["b1"], kparams["w2"],
                              kparams["b2"], kparams["w3"], kparams["b3"])
    B, D = x.shape
    h1_dim = w1.shape[1]          # 128
    h2_dim = w2.shape[1]          # 256
    n_pad = w3.shape[1]           # 128-lane-padded classes

    use_bf16 = (w1.dtype == jnp.bfloat16)
    out_dtype = jnp.bfloat16 if use_bf16 else jnp.float32

    tb = _choose_tile(B, tile_b)
    grid = (pl.cdiv(B, tb),)      # partial edge block handled by Pallas masking

    # x / out stream along the batch grid axis; weights/biases have constant
    # index_maps so they are fetched once and stay VMEM-resident.
    in_specs = [
        pl.BlockSpec((tb, D), lambda i: (i, 0)),            # x tile
        pl.BlockSpec((D, h1_dim), lambda i: (0, 0)),        # w1
        pl.BlockSpec((1, h1_dim), lambda i: (0, 0)),        # b1
        pl.BlockSpec((h1_dim, h2_dim), lambda i: (0, 0)),   # w2
        pl.BlockSpec((1, h2_dim), lambda i: (0, 0)),        # b2
        pl.BlockSpec((h2_dim, n_pad), lambda i: (0, 0)),    # w3 (lane-padded)
        pl.BlockSpec((1, n_pad), lambda i: (0, 0)),         # b3 (lane-padded)
    ]
    out_spec = pl.BlockSpec((tb, n_pad), lambda i: (i, 0))

    rows = grid[0] * tb
    flops = 2 * rows * (D * h1_dim + h1_dim * h2_dim + h2_dim * n_pad)
    transcendentals = rows * (h1_dim + h2_dim)          # sigmoids (exp on EUP)
    w_bytes = sum(int(a.size) * a.dtype.itemsize for a in (w1, b1, w2, b2, w3, b3))
    out_item = 2 if use_bf16 else 4
    bytes_accessed = int(x.size) * x.dtype.itemsize + w_bytes + B * n_pad * out_item

    out = pl.pallas_call(
        mlp_kernel,
        out_shape=jax.ShapeDtypeStruct((B, n_pad), out_dtype),
        grid=grid,
        in_specs=in_specs,
        out_specs=out_spec,
        compiler_params=pltpu.CompilerParams(
            dimension_semantics=("parallel",),
        ),
        cost_estimate=pl.CostEstimate(
            flops=flops,
            transcendentals=transcendentals,
            bytes_accessed=bytes_accessed,
        ),
    )(x, w1, b1, w2, b2, w3, b3)

    # Slice padded logit columns off and return f32 (tiny; done in XLA wrapper).
    return out[:, :n_classes].astype(jnp.float32)


def init_params(key, input_dims, n_classes):
    # Deterministic init mimicking nn.Linear default U(-1/sqrt(fan_in), 1/sqrt(fan_in)).
    def linear(key, fan_in, fan_out):
        kw, kb = jax.random.split(key)
        bound = 1.0 / jnp.sqrt(fan_in)
        # stored as (in, out) == torch weight.T
        w = jax.random.uniform(kw, (fan_in, fan_out), jnp.float32, -bound, bound)
        b = jax.random.uniform(kb, (1, fan_out), jnp.float32, -bound, bound)
        return w, b

    k1, k2, k3 = jax.random.split(key, 3)
    w1, b1 = linear(k1, input_dims, 128)
    w2, b2 = linear(k2, 128, 256)
    w3, b3 = linear(k3, 256, n_classes)
    return {"w1": w1, "b1": b1, "w2": w2, "b2": b2, "w3": w3, "b3": b3}


if __name__ == "__main__":
    key = jax.random.PRNGKey(0)
    k_params, k_x = jax.random.split(key)

    batch = 8
    input_dims = 64     # LinearClassifier(input_dims=(64,))
    n_classes = 10

    params = init_params(k_params, input_dims, n_classes)
    x = jax.random.normal(k_x, (batch, input_dims), jnp.float32)

    def ref_forward(xin, p):
        h = jax.nn.sigmoid(xin @ p["w1"] + p["b1"])
        h = jax.nn.sigmoid(h @ p["w2"] + p["b2"])
        return h @ p["w3"] + p["b3"]

    ref = ref_forward(x, params)

    # 1) f32 MXU path: tight check against the plain-JAX reference.
    kparams_f32 = prepare_params(params, mxu_dtype=jnp.float32)
    out_f32 = jax.block_until_ready(
        linear_classifier_forward(x, kparams_f32, n_classes=n_classes))
    assert out_f32.shape == (batch, n_classes)
    assert jnp.allclose(out_f32, ref, atol=1e-5, rtol=1e-5)

    # 2) bf16 MXU + bf16 writeback (default perf mode): looser tolerance.
    kparams = prepare_params(params)   # bf16 weights
    out_bf16 = jax.block_until_ready(
        linear_classifier_forward(x, kparams, n_classes=n_classes))
    assert out_bf16.shape == (batch, n_classes)
    assert jnp.allclose(out_bf16, ref, atol=3e-2, rtol=3e-2)

    # 3) Multi-tile path with a partial edge block (B not a multiple of the tile).
    big_B = 600
    xb = jax.random.normal(jax.random.PRNGKey(1), (big_B, input_dims), jnp.float32)
    outb = jax.block_until_ready(
        linear_classifier_forward(xb, kparams, n_classes=n_classes))
    refb = ref_forward(xb, params)
    assert outb.shape == (big_B, n_classes)
    assert bool(jnp.isfinite(outb).all())
    assert jnp.allclose(outb, refb, atol=3e-2, rtol=3e-2)

    print("KERNEL_OK")
</pallas_src>

<mosaic_0001>
module attributes {stable_mosaic.version = 11 : i64} {
  func.func @mlp_kernel(%arg0: i32, %arg1: memref<8x64xf32, #tpu.memory_space<vmem>>, %arg2: memref<64x128xf32, #tpu.memory_space<vmem>>, %arg3: memref<1x128xf32, #tpu.memory_space<vmem>>, %arg4: memref<128x256xf32, #tpu.memory_space<vmem>>, %arg5: memref<1x256xf32, #tpu.memory_space<vmem>>, %arg6: memref<256x128xf32, #tpu.memory_space<vmem>>, %arg7: memref<1x128xf32, #tpu.memory_space<vmem>>, %arg8: memref<8x128xf32, #tpu.memory_space<vmem>>) attributes {dimension_semantics = [#tpu.dimension_semantics<parallel>], iteration_bounds = array<i64: 1>, scalar_prefetch = 0 : i64, scratch_operands = 0 : i64, tpu.core_type = #tpu.core_type<tc>, window_params = [{transform_indices = @transform_0, window_bounds = array<i64: 8, 64>}, {pipeline_mode = #tpu.pipeline_mode<synchronous>, transform_indices = @transform_1, window_bounds = array<i64: 64, 128>}, {pipeline_mode = #tpu.pipeline_mode<synchronous>, transform_indices = @transform_2, window_bounds = array<i64: 1, 128>}, {pipeline_mode = #tpu.pipeline_mode<synchronous>, transform_indices = @transform_3, window_bounds = array<i64: 128, 256>}, {pipeline_mode = #tpu.pipeline_mode<synchronous>, transform_indices = @transform_4, window_bounds = array<i64: 1, 256>}, {pipeline_mode = #tpu.pipeline_mode<synchronous>, transform_indices = @transform_5, window_bounds = array<i64: 256, 128>}, {pipeline_mode = #tpu.pipeline_mode<synchronous>, transform_indices = @transform_6, window_bounds = array<i64: 1, 128>}, {transform_indices = @transform_7, window_bounds = array<i64: 8, 128>}]} {
    %c0 = arith.constant 0 : index
    %c0_0 = arith.constant 0 : index
    %0 = vector.load %arg1[%c0, %c0_0] : memref<8x64xf32, #tpu.memory_space<vmem>>, vector<8x64xf32>
    %c0_1 = arith.constant 0 : index
    %c0_2 = arith.constant 0 : index
    %1 = vector.load %arg2[%c0_1, %c0_2] : memref<64x128xf32, #tpu.memory_space<vmem>>, vector<64x128xf32>
    %cst = arith.constant dense<0.000000e+00> : vector<8x128xf32>
    %2 = tpu.matmul %0, %1, %cst {dimension_numbers = #tpu.dot_dimension_numbers<[1], [0], [0], [1], [0, 0, 1, 1], [], []>} : vector<8x64xf32>, vector<64x128xf32>, vector<8x128xf32> -> vector<8x128xf32>
    %c0_3 = arith.constant 0 : index
    %c0_4 = arith.constant 0 : index
    %3 = vector.load %arg3[%c0_3, %c0_4] : memref<1x128xf32, #tpu.memory_space<vmem>>, vector<1x128xf32>
    %4 = vector.broadcast %3 : vector<1x128xf32> to vector<8x128xf32>
    %5 = arith.addf %2, %4 : vector<8x128xf32>
    %6 = arith.negf %5 : vector<8x128xf32>
    %7 = math.exp %6 : vector<8x128xf32>
    %cst_5 = arith.constant 1.000000e+00 : f32
    %8 = vector.broadcast %cst_5 : f32 to vector<8x128xf32>
    %9 = arith.addf %8, %7 : vector<8x128xf32>
    %10 = arith.divf %8, %9 : vector<8x128xf32>
    %c0_6 = arith.constant 0 : index
    %c0_7 = arith.constant 0 : index
    %11 = vector.load %arg4[%c0_6, %c0_7] : memref<128x256xf32, #tpu.memory_space<vmem>>, vector<128x256xf32>
    %cst_8 = arith.constant dense<0.000000e+00> : vector<8x256xf32>
    %12 = tpu.matmul %10, %11, %cst_8 {dimension_numbers = #tpu.dot_dimension_numbers<[1], [0], [0], [1], [0, 0, 1, 1], [], []>} : vector<8x128xf32>, vector<128x256xf32>, vector<8x256xf32> -> vector<8x256xf32>
    %c0_9 = arith.constant 0 : index
    %c0_10 = arith.constant 0 : index
    %13 = vector.load %arg5[%c0_9, %c0_10] : memref<1x256xf32, #tpu.memory_space<vmem>>, vector<1x256xf32>
    %14 = vector.broadcast %13 : vector<1x256xf32> to vector<8x256xf32>
    %15 = arith.addf %12, %14 : vector<8x256xf32>
    %16 = arith.negf %15 : vector<8x256xf32>
    %17 = math.exp %16 : vector<8x256xf32>
    %cst_11 = arith.constant 1.000000e+00 : f32
    %18 = vector.broadcast %cst_11 : f32 to vector<8x256xf32>
    %19 = arith.addf %18, %17 : vector<8x256xf32>
    %20 = arith.divf %18, %19 : vector<8x256xf32>
    %c0_12 = arith.constant 0 : index
    %c0_13 = arith.constant 0 : index
    %21 = vector.load %arg6[%c0_12, %c0_13] : memref<256x128xf32, #tpu.memory_space<vmem>>, vector<256x128xf32>
    %cst_14 = arith.constant dense<0.000000e+00> : vector<8x128xf32>
    %22 = tpu.matmul %20, %21, %cst_14 {dimension_numbers = #tpu.dot_dimension_numbers<[1], [0], [0], [1], [0, 0, 1, 1], [], []>} : vector<8x256xf32>, vector<256x128xf32>, vector<8x128xf32> -> vector<8x128xf32>
    %c0_15 = arith.constant 0 : index
    %c0_16 = arith.constant 0 : index
    %23 = vector.load %arg7[%c0_15, %c0_16] : memref<1x128xf32, #tpu.memory_space<vmem>>, vector<1x128xf32>
    %24 = vector.broadcast %23 : vector<1x128xf32> to vector<8x128xf32>
    %25 = arith.addf %22, %24 : vector<8x128xf32>
    %c0_17 = arith.constant 0 : index
    %c0_18 = arith.constant 0 : index
    %26 = vector.load %arg8[%c0_17, %c0_18] : memref<8x128xf32, #tpu.memory_space<vmem>>, vector<8x128xf32>
    tpu.vector_store %arg8[%c0_17, %c0_18], %25 {strides = array<i32>} : memref<8x128xf32, #tpu.memory_space<vmem>>, vector<8x128xf32>,
    return
  }
  func.func @transform_0(%arg0: i32) -> (i32, i32) {
    %c0_i32 = arith.constant 0 : i32
    %c0_i32_0 = arith.constant 0 : i32
    return %arg0, %c0_i32 : i32, i32
  }
  func.func @transform_1(%arg0: i32) -> (i32, i32) {
    %c0_i32 = arith.constant 0 : i32
    %c0_i32_0 = arith.constant 0 : i32
    %c0_i32_1 = arith.constant 0 : i32
    return %c0_i32, %c0_i32_0 : i32, i32
  }
  func.func @transform_2(%arg0: i32) -> (i32, i32) {
    %c0_i32 = arith.constant 0 : i32
    %c0_i32_0 = arith.constant 0 : i32
    %c0_i32_1 = arith.constant 0 : i32
    return %c0_i32, %c0_i32_0 : i32, i32
  }
  func.func @transform_3(%arg0: i32) -> (i32, i32) {
    %c0_i32 = arith.constant 0 : i32
    %c0_i32_0 = arith.constant 0 : i32
    %c0_i32_1 = arith.constant 0 : i32
    return %c0_i32, %c0_i32_0 : i32, i32
  }
  func.func @transform_4(%arg0: i32) -> (i32, i32) {
    %c0_i32 = arith.constant 0 : i32
    %c0_i32_0 = arith.constant 0 : i32
    %c0_i32_1 = arith.constant 0 : i32
    return %c0_i32, %c0_i32_0 : i32, i32
  }
  func.func @transform_5(%arg0: i32) -> (i32, i32) {
    %c0_i32 = arith.constant 0 : i32
    %c0_i32_0 = arith.constant 0 : i32
    %c0_i32_1 = arith.constant 0 : i32
    return %c0_i32, %c0_i32_0 : i32, i32
  }
  func.func @transform_6(%arg0: i32) -> (i32, i32) {
    %c0_i32 = arith.constant 0 : i32
    %c0_i32_0 = arith.constant 0 : i32
    %c0_i32_1 = arith.constant 0 : i32
    return %c0_i32, %c0_i32_0 : i32, i32
  }
  func.func @transform_7(%arg0: i32) -> (i32, i32) {
    %c0_i32 = arith.constant 0 : i32
    %c0_i32_0 = arith.constant 0 : i32
    return %arg0, %c0_i32 : i32, i32
  }
}

</mosaic_0001>

<llo_original>
// kernel: linear_classifier_forward.1
$region0: #{linear_classifier_forward.1}
  #allocation0 [shape = 'u32[]', space=smem, size = 0x4, offset = 0x4, fixed_abs, tag = 'smem constant byte address 0x4 - core index']
  #allocation1 [shape = 'u32[144,128]{1,0:T(1,128)}', space=vmem, size = 0x12000, scoped, tag = 'internal scratch']
  %s0 = inlined_call_operand.hbm [shape: f32[8,64], index: 0, kind: input, shape index: {}]
  %s1 = inlined_call_operand.hbm [shape: f32[64,128], index: 1, kind: input, shape index: {}]
  %s2 = inlined_call_operand.vmem [shape: f32[1,128], index: 2, kind: input, shape index: {}]
  %s3 = inlined_call_operand.hbm [shape: f32[128,256], index: 3, kind: input, shape index: {}]
  %s4 = inlined_call_operand.vmem [shape: f32[1,256], index: 4, kind: input, shape index: {}]
  %s5 = inlined_call_operand.hbm [shape: f32[256,128], index: 5, kind: input, shape index: {}]
  %s6 = inlined_call_operand.vmem [shape: f32[1,128], index: 6, kind: input, shape index: {}]
  %s7 = inlined_call_operand.hbm [shape: f32[8,128], index: 7, kind: output, shape index: {}]
  %s8 = sld [smem:[#allocation0]]
  $region54: #{linear_classifier_forward.1} parent=0
    _
  %s10 = ssub.s32 1, %s8
  %s11 = scalar_select 0, %s10, %s8
  $region1: #{linear_classifier_forward.1} parent=0
    #allocation2 [shape = 'u8[4096]{0}', space=vmem, size = 0x1000, scoped, tag = 'input window, operand 0, single buffered']
    #allocation3 [shape = 's32[1]{0}', space=sflag, size = 0x4, scoped, tag = 'scoped memory for linear_classifier_forward.1']
    #allocation4 [shape = 's32[1]{0}', space=sflag, size = 0x4, scoped, tag = 'scoped memory for linear_classifier_forward.1']
    #allocation5 [shape = 'u8[32768]{0}', space=vmem, size = 0x8000, scoped, tag = 'input window, operand 1, single buffered']
    #allocation6 [shape = 's32[1]{0}', space=sflag, size = 0x4, scoped, tag = 'scoped memory for linear_classifier_forward.1']
    #allocation7 [shape = 'u8[131072]{0}', space=vmem, size = 0x20000, scoped, tag = 'input window, operand 3, single buffered']
    #allocation8 [shape = 'u8[131072]{0}', space=vmem, size = 0x20000, scoped, tag = 'input window, operand 5, single buffered']
    #allocation9 [shape = 's32[1]{0}', space=sflag, size = 0x4, scoped, tag = 'scoped memory for linear_classifier_forward.1']
    #allocation10 [shape = 'u8[4096]{0}', space=vmem, size = 0x1000, scoped, tag = 'output window, operand 0, single buffered']
    %12 = vsyncpa [#allocation3], 0
    %13 = vsyncpa [#allocation6], 0
    %14 = vsyncpa [#allocation9], 0
    %15 = vsyncpa [#allocation4], 0
    // Predicated region
    $region2: #{linear_classifier_forward.1} parent=1 // pred_check
      _
    $region3: #{linear_classifier_forward.1} parent=1 // pred_check_branch
      %17 = sbr.rel (0) target = $region5
    $region4: #{linear_classifier_forward.1} parent=1 // pred_region
      %s19 = ssub.s32 128, 128
      %20 = vsyncadd [#allocation3], %s19
      %s22 = sshll.u32 [#allocation2], 4
      %s23 = int_to_ptr.vmem [resolvable:$true] %s22
      %25 = dma.hbm_to_vmem [thread:$0]  %s0, 128, %s23, [#allocation3]
    $region5: #{linear_classifier_forward.1} parent=1 // pred_fallthru
      _
    // Predicated region
    $region6: #{linear_classifier_forward.1} parent=1 // pred_check
      _
    $region7: #{linear_classifier_forward.1} parent=1 // pred_check_branch
      %27 = sbr.rel (0) target = $region9
    $region8: #{linear_classifier_forward.1} parent=1 // pred_region
      %s29 = ssub.s32 1024, 1024
      %30 = vsyncadd [#allocation6], %s29
      %s31 = sshll.u32 [#allocation5], 4
      %s32 = int_to_ptr.vmem [resolvable:$true] %s31
      %37 = dma.hbm_to_vmem [thread:$0]  %s1, 1024, %s32, [#allocation6], 128, 128, 8
    $region9: #{linear_classifier_forward.1} parent=1 // pred_fallthru
      _
    // Predicated region
    $region10: #{linear_classifier_forward.1} parent=1 // pred_check
      _
    $region11: #{linear_classifier_forward.1} parent=1 // pred_check_branch
      %39 = sbr.rel (0) target = $region13
    $region12: #{linear_classifier_forward.1} parent=1 // pred_region
      _
    $region13: #{linear_classifier_forward.1} parent=1 // pred_fallthru
      _
    // Predicated region
    $region14: #{linear_classifier_forward.1} parent=1 // pred_check
      _
    $region15: #{linear_classifier_forward.1} parent=1 // pred_check_branch
      %41 = sbr.rel (0) target = $region17
    $region16: #{linear_classifier_forward.1} parent=1 // pred_region
      %s43 = ssub.s32 4096, 4096
      %44 = vsyncadd [#allocation6], %s43
      %s45 = sshll.u32 [#allocation7], 4
      %s46 = int_to_ptr.vmem [resolvable:$true] %s45
      %51 = dma.hbm_to_vmem [thread:$0]  %s3, 4096, %s46, [#allocation6], 256, 256, 16
    $region17: #{linear_classifier_forward.1} parent=1 // pred_fallthru
      _
    // Predicated region
    $region18: #{linear_classifier_forward.1} parent=1 // pred_check
      _
    $region19: #{linear_classifier_forward.1} parent=1 // pred_check_branch
      %53 = sbr.rel (0) target = $region21
    $region20: #{linear_classifier_forward.1} parent=1 // pred_region
      _
    $region21: #{linear_classifier_forward.1} parent=1 // pred_fallthru
      _
    // Predicated region
    $region22: #{linear_classifier_forward.1} parent=1 // pred_check
      _
    $region23: #{linear_classifier_forward.1} parent=1 // pred_check_branch
      %55 = sbr.rel (0) target = $region25
    $region24: #{linear_classifier_forward.1} parent=1 // pred_region
      %s57 = ssub.s32 4096, 4096
      %58 = vsyncadd [#allocation9], %s57
      %s59 = sshll.u32 [#allocation8], 4
      %s60 = int_to_ptr.vmem [resolvable:$true] %s59
      %65 = dma.hbm_to_vmem [thread:$0]  %s5, 4096, %s60, [#allocation9], 128, 128, 8
    $region25: #{linear_classifier_forward.1} parent=1 // pred_fallthru
      _
    // Predicated region
    $region26: #{linear_classifier_forward.1} parent=1 // pred_check
      _
    $region27: #{linear_classifier_forward.1} parent=1 // pred_check_branch
      %67 = sbr.rel (0) target = $region29
    $region28: #{linear_classifier_forward.1} parent=1 // pred_region
      _
    $region29: #{linear_classifier_forward.1} parent=1 // pred_fallthru
      _
    // Predicated region
    $region30: #{linear_classifier_forward.1} parent=1 // pred_check
      _
    $region31: #{linear_classifier_forward.1} parent=1 // pred_check_branch
      %69 = sbr.rel (0) target = $region33
    $region32: #{linear_classifier_forward.1} parent=1 // pred_region
      %70 = dma.done [#allocation3], 128
    $region33: #{linear_classifier_forward.1} parent=1 // pred_fallthru
      _
    // Predicated region
    $region34: #{linear_classifier_forward.1} parent=1 // pred_check
      _
    $region35: #{linear_classifier_forward.1} parent=1 // pred_check_branch
      %72 = sbr.rel (0) target = $region37
    $region36: #{linear_classifier_forward.1} parent=1 // pred_region
      %73 = dma.done [#allocation6], 1024
    $region37: #{linear_classifier_forward.1} parent=1 // pred_fallthru
      _
    // Predicated region
    $region38: #{linear_classifier_forward.1} parent=1 // pred_check
      _
    $region39: #{linear_classifier_forward.1} parent=1 // pred_check_branch
      %75 = sbr.rel (0) target = $region41
    $region40: #{linear_classifier_forward.1} parent=1 // pred_region
      %76 = dma.done [#allocation6], 4096
    $region41: #{linear_classifier_forward.1} parent=1 // pred_fallthru
      _
    // Predicated region
    $region42: #{linear_classifier_forward.1} parent=1 // pred_check
      _
    $region43: #{linear_classifier_forward.1} parent=1 // pred_check_branch
      %78 = sbr.rel (0) target = $region45
    $region44: #{linear_classifier_forward.1} parent=1 // pred_region
      %79 = dma.done [#allocation9], 4096
    $region45: #{linear_classifier_forward.1} parent=1 // pred_fallthru
      _
    %v80 = vld [vmem:[#allocation2] sm:$0xff]
    %v81 = vld [vmem:[#allocation5] sm:$0xff]
    %v82 = vld [vmem:[#allocation5 + $0x8] sm:$0xff]
    %v83 = vld [vmem:[#allocation5 + $0x10] sm:$0xff]
    %v84 = vld [vmem:[#allocation5 + $0x18] sm:$0xff]
    %v85 = vld [vmem:[#allocation5 + $0x20] sm:$0xff]
    %v86 = vld [vmem:[#allocation5 + $0x28] sm:$0xff]
    %v87 = vld [vmem:[#allocation5 + $0x30] sm:$0xff]
    %v88 = vld [vmem:[#allocation5 + $0x38] sm:$0xff]
    %v89 = vld [vmem:[%s2] sm:$0x1]
    %v91 = vlaneseq
    %v92 = vshrl.u32 %v91, 7
    %v93 = vsub.s32 0, %v92
    %v94 = vrot.slane %v89, %v93
    %vm96 = vcmask 523264
    %v98 = vsel %vm96, %v80, 0
    %100 = vmatprep.subr.mxu0 0.0
    %101 = vmatpush1.msra.mxu0 %v81
    %102 = vmatprep.subr.mxu0 0.0
    %103 = vmatpush1.msra.mxu0 %v82
    %104 = vmatprep.subr.mxu0 0.0
    %105 = vmatpush1.msra.mxu0 %v83
    %106 = vmatprep.subr.mxu0 0.0
    %107 = vmatpush1.msra.mxu0 %v84
    %108 = vmatprep.subr.mxu0 0.0
    %109 = vmatpush1.msra.mxu0 %v85
    %110 = vmatprep.subr.mxu0 0.0
    %111 = vmatpush1.msra.mxu0 %v86
    %112 = vmatprep.subr.mxu0 0.0
    %113 = vmatpush1.msra.mxu0 %v87
    %114 = vmatprep.subr.mxu0 0.0
    %115 = vmatpush1.msra.mxu0 %v88
    %116 = vmatprep.subr.mxu0 0.0
    %117 = vmatpush1.msra.mxu0 0.0
    %118 = vmatprep.subr.mxu0 0.0
    %119 = vmatpush1.msra.mxu0 0.0
    %120 = vmatprep.subr.mxu0 0.0
    %121 = vmatpush1.msra.mxu0 0.0
    %122 = vmatprep.subr.mxu0 0.0
    %123 = vmatpush1.msra.mxu0 0.0
    %124 = vmatprep.subr.mxu0 0.0
    %125 = vmatpush1.msra.mxu0 0.0
    %126 = vmatprep.subr.mxu0 0.0
    %127 = vmatpush1.msra.mxu0 0.0
    %128 = vmatprep.subr.mxu0 0.0
    %129 = vmatpush1.msra.mxu0 0.0
    %130 = vmatprep.subr.mxu0 0.0
    %131 = vmatpush1.msra.mxu0 0.0
    %132 = vmatprep.subr.mxu0 0.0
    %133 = vmatpush1.msra.mxu0 0.0
    %134 = vmatprep.subr.mxu0 0.0
    %135 = vmatpush1.msra.mxu0 0.0
    %136 = vmatprep.subr.mxu0 0.0
    %137 = vmatpush1.msra.mxu0 0.0
    %138 = vmatprep.subr.mxu0 0.0
    %139 = vmatpush1.msra.mxu0 0.0
    %140 = vmatprep.subr.mxu0 0.0
    %141 = vmatpush1.msra.mxu0 0.0
    %142 = vmatprep.subr.mxu0 0.0
    %143 = vmatpush1.msra.mxu0 0.0
    %144 = vmatprep.subr.mxu0 0.0
    %145 = vmatpush1.msra.mxu0 0.0
    %146 = vmatprep.subr.mxu0 0.0
    %147 = vmatpush1.msra.mxu0 0.0
    %148 = vmatprep.subr.mxu0 0.0
    %149 = vmatpush1.msra.mxu0 0.0
    %150 = vmatprep.subr.mxu0 0.0
    %151 = vmatpush1.msra.mxu0 0.0
    %152 = vmatprep.subr.mxu0 0.0
    %153 = vmatpush1.msra.mxu0 0.0
    %154 = vmatprep.subr.mxu0 0.0
    %155 = vmatpush1.msra.mxu0 0.0
    %156 = vmatprep.subr.mxu0 0.0
    %157 = vmatpush1.msra.mxu0 0.0
    %158 = vmatprep.subr.mxu0 0.0
    %159 = vmatpush1.msra.mxu0 0.0
    %160 = vmatprep.subr.mxu0 0.0
    %161 = vmatpush1.msra.mxu0 0.0
    %162 = vmatprep.subr.mxu0 0.0
    %163 = vmatpush1.msra.mxu0 0.0
    %164 = vmatprep.mubr.f32.mxu0 0.0
    %165 = vmatmul.mubr.f32.gmra.mrb[0].mxu0 %v98
    %v166 = vpop.f32.mrb[0].mxu0
    %v167 = vadd.f32 %v94, %v166
    %v168 = vpop.f32.mrb[0].mxu0
    %169 = vdwg.mxu0
    %v170 = vxor.u32 %v167, 2147483648
    %v171 = vmul.f32 %v170, 1.442695
    %v172 = vpow.pop %v171
    %v173 = vadd.f32 %v172, 1.0
    %v174 = vrcp.pop %v173
    %v175 = vmul.f32 1.0, %v174
    %v176 = vld [vmem:[#allocation7] sm:$0xff]
    %v177 = vld [vmem:[#allocation7 + $0x8] sm:$0xff]
    %v178 = vld [vmem:[#allocation7 + $0x10] sm:$0xff]
    %v179 = vld [vmem:[#allocation7 + $0x18] sm:$0xff]
    %v180 = vld [vmem:[#allocation7 + $0x20] sm:$0xff]
    %v181 = vld [vmem:[#allocation7 + $0x28] sm:$0xff]
    %v182 = vld [vmem:[#allocation7 + $0x30] sm:$0xff]
    %v183 = vld [vmem:[#allocation7 + $0x38] sm:$0xff]
    %v184 = vld [vmem:[#allocation7 + $0x40] sm:$0xff]
    %v185 = vld [vmem:[#allocation7 + $0x48] sm:$0xff]
    %v186 = vld [vmem:[#allocation7 + $0x50] sm:$0xff]
    %v187 = vld [vmem:[#allocation7 + $0x58] sm:$0xff]
    %v188 = vld [vmem:[#allocation7 + $0x60] sm:$0xff]
    %v189 = vld [vmem:[#allocation7 + $0x68] sm:$0xff]
    %v190 = vld [vmem:[#allocation7 + $0x70] sm:$0xff]
    %v191 = vld [vmem:[#allocation7 + $0x78] sm:$0xff]
    %v192 = vld [vmem:[#allocation7 + $0x80] sm:$0xff]
    %v193 = vld [vmem:[#allocation7 + $0x88] sm:$0xff]
    %v194 = vld [vmem:[#allocation7 + $0x90] sm:$0xff]
    %v195 = vld [vmem:[#allocation7 + $0x98] sm:$0xff]
    %v196 = vld [vmem:[#allocation7 + $0xa0] sm:$0xff]
    %v197 = vld [vmem:[#allocation7 + $0xa8] sm:$0xff]
    %v198 = vld [vmem:[#allocation7 + $0xb0] sm:$0xff]
    %v199 = vld [vmem:[#allocation7 + $0xb8] sm:$0xff]
    %v200 = vld [vmem:[#allocation7 + $0xc0] sm:$0xff]
    %v201 = vld [vmem:[#allocation7 + $0xc8] sm:$0xff]
    %v202 = vld [vmem:[#allocation7 + $0xd0] sm:$0xff]
    %v203 = vld [vmem:[#allocation7 + $0xd8] sm:$0xff]
    %v204 = vld [vmem:[#allocation7 + $0xe0] sm:$0xff]
    %v205 = vld [vmem:[#allocation7 + $0xe8] sm:$0xff]
    %v206 = vld [vmem:[#allocation7 + $0xf0] sm:$0xff]
    %v207 = vld [vmem:[#allocation7 + $0xf8] sm:$0xff]
    %v208 = vld [vmem:[%s4] sm:$0x3]
    %v210 = vlaneseq
    %v211 = vshrl.u32 %v210, 7
    %v212 = vsub.s32 0, %v211
    %v213 = vrot.slane %v208, %v212
    %v214 = vlaneseq
    %v215 = vshrl.u32 %v214, 7
    %v216 = vsub.s32 1, %v215
    %v217 = vrot.slane %v208, %v216
    %220 = vmatprep.subr.mxu0 %v177
    %221 = vmatpush1.msra.mxu0 %v176
    %222 = vmatprep.subr.mxu0 %v179
    %223 = vmatpush1.msra.mxu0 %v178
    %224 = vmatprep.subr.mxu0 %v181
    %225 = vmatpush1.msra.mxu0 %v180
    %226 = vmatprep.subr.mxu0 %v183
    %227 = vmatpush1.msra.mxu0 %v182
    %228 = vmatprep.subr.mxu0 %v185
    %229 = vmatpush1.msra.mxu0 %v184
    %230 = vmatprep.subr.mxu0 %v187
    %231 = vmatpush1.msra.mxu0 %v186
    %232 = vmatprep.subr.mxu0 %v189
    %233 = vmatpush1.msra.mxu0 %v188
    %234 = vmatprep.subr.mxu0 %v191
    %235 = vmatpush1.msra.mxu0 %v190
    %236 = vmatprep.subr.mxu0 %v193
    %237 = vmatpush1.msra.mxu0 %v192
    %238 = vmatprep.subr.mxu0 %v195
    %239 = vmatpush1.msra.mxu0 %v194
    %240 = vmatprep.subr.mxu0 %v197
    %241 = vmatpush1.msra.mxu0 %v196
    %242 = vmatprep.subr.mxu0 %v199
    %243 = vmatpush1.msra.mxu0 %v198
    %244 = vmatprep.subr.mxu0 %v201
    %245 = vmatpush1.msra.mxu0 %v200
    %246 = vmatprep.subr.mxu0 %v203
    %247 = vmatpush1.msra.mxu0 %v202
    %248 = vmatprep.subr.mxu0 %v205
    %249 = vmatpush1.msra.mxu0 %v204
    %250 = vmatprep.subr.mxu0 %v207
    %251 = vmatpush1.msra.mxu0 %v206
    %252 = vmatprep.subr.mxu0 0.0
    %253 = vmatpush1.msra.mxu0 0.0
    %254 = vmatprep.subr.mxu0 0.0
    %255 = vmatpush1.msra.mxu0 0.0
    %256 = vmatprep.subr.mxu0 0.0
    %257 = vmatpush1.msra.mxu0 0.0
    %258 = vmatprep.subr.mxu0 0.0
    %259 = vmatpush1.msra.mxu0 0.0
    %260 = vmatprep.subr.mxu0 0.0
    %261 = vmatpush1.msra.mxu0 0.0
    %262 = vmatprep.subr.mxu0 0.0
    %263 = vmatpush1.msra.mxu0 0.0
    %264 = vmatprep.subr.mxu0 0.0
    %265 = vmatpush1.msra.mxu0 0.0
    %266 = vmatprep.subr.mxu0 0.0
    %267 = vmatpush1.msra.mxu0 0.0
    %268 = vmatprep.subr.mxu0 0.0
    %269 = vmatpush1.msra.mxu0 0.0
    %270 = vmatprep.subr.mxu0 0.0
    %271 = vmatpush1.msra.mxu0 0.0
    %272 = vmatprep.subr.mxu0 0.0
    %273 = vmatpush1.msra.mxu0 0.0
    %274 = vmatprep.subr.mxu0 0.0
    %275 = vmatpush1.msra.mxu0 0.0
    %276 = vmatprep.subr.mxu0 0.0
    %277 = vmatpush1.msra.mxu0 0.0
    %278 = vmatprep.subr.mxu0 0.0
    %279 = vmatpush1.msra.mxu0 0.0
    %280 = vmatprep.subr.mxu0 0.0
    %281 = vmatpush1.msra.mxu0 0.0
    %282 = vmatprep.subr.mxu0 0.0
    %283 = vmatpush1.msra.mxu0 0.0
    %284 = vmatprep.mubr.f32.mxu0 0.0
    %285 = vmatmul.mubr.f32.gmra.mrb[0].mxu0 %v175
    %v286 = vpop.f32.mrb[0].mxu0
    %v287 = vadd.f32 %v213, %v286
    %v288 = vpop.f32.mrb[0].mxu0
    %v289 = vadd.f32 %v217, %v288
    %290 = vdwg.mxu0
    %v291 = vxor.u32 %v287, 2147483648
    %v292 = vxor.u32 %v289, 2147483648
    %v293 = vmul.f32 %v291, 1.442695
    %v294 = vpow.pop %v293
    %v295 = vmul.f32 %v292, 1.442695
    %v296 = vpow.pop %v295
    %v297 = vadd.f32 %v294, 1.0
    %v298 = vadd.f32 %v296, 1.0
    %v299 = vrcp.pop %v297
    %v300 = vmul.f32 1.0, %v299
    %v301 = vrcp.pop %v298
    %v302 = vmul.f32 1.0, %v301
    %v303 = vld [vmem:[#allocation8] sm:$0xff]
    %v304 = vld [vmem:[#allocation8 + $0x8] sm:$0xff]
    %v305 = vld [vmem:[#allocation8 + $0x10] sm:$0xff]
    %v306 = vld [vmem:[#allocation8 + $0x18] sm:$0xff]
    %v307 = vld [vmem:[#allocation8 + $0x20] sm:$0xff]
    %v308 = vld [vmem:[#allocation8 + $0x28] sm:$0xff]
    %v309 = vld [vmem:[#allocation8 + $0x30] sm:$0xff]
    %v310 = vld [vmem:[#allocation8 + $0x38] sm:$0xff]
    %v311 = vld [vmem:[#allocation8 + $0x40] sm:$0xff]
    %v312 = vld [vmem:[#allocation8 + $0x48] sm:$0xff]
    %v313 = vld [vmem:[#allocation8 + $0x50] sm:$0xff]
    %v314 = vld [vmem:[#allocation8 + $0x58] sm:$0xff]
    %v315 = vld [vmem:[#allocation8 + $0x60] sm:$0xff]
    %v316 = vld [vmem:[#allocation8 + $0x68] sm:$0xff]
    %v317 = vld [vmem:[#allocation8 + $0x70] sm:$0xff]
    %v318 = vld [vmem:[#allocation8 + $0x78] sm:$0xff]
    %v319 = vld [vmem:[#allocation8 + $0x80] sm:$0xff]
    %v320 = vld [vmem:[#allocation8 + $0x88] sm:$0xff]
    %v321 = vld [vmem:[#allocation8 + $0x90] sm:$0xff]
    %v322 = vld [vmem:[#allocation8 + $0x98] sm:$0xff]
    %v323 = vld [vmem:[#allocation8 + $0xa0] sm:$0xff]
    %v324 = vld [vmem:[#allocation8 + $0xa8] sm:$0xff]
    %v325 = vld [vmem:[#allocation8 + $0xb0] sm:$0xff]
    %v326 = vld [vmem:[#allocation8 + $0xb8] sm:$0xff]
    %v327 = vld [vmem:[#allocation8 + $0xc0] sm:$0xff]
    %v328 = vld [vmem:[#allocation8 + $0xc8] sm:$0xff]
    %v329 = vld [vmem:[#allocation8 + $0xd0] sm:$0xff]
    %v330 = vld [vmem:[#allocation8 + $0xd8] sm:$0xff]
    %v331 = vld [vmem:[#allocation8 + $0xe0] sm:$0xff]
    %v332 = vld [vmem:[#allocation8 + $0xe8] sm:$0xff]
    %v333 = vld [vmem:[#allocation8 + $0xf0] sm:$0xff]
    %v334 = vld [vmem:[#allocation8 + $0xf8] sm:$0xff]
    %v335 = vld [vmem:[%s6] sm:$0x1]
    %v337 = vlaneseq
    %v338 = vshrl.u32 %v337, 7
    %v339 = vsub.s32 0, %v338
    %v340 = vrot.slane %v335, %v339
    %342 = vmatprep.subr.mxu0 0.0
    %343 = vmatpush1.msra.mxu0 %v303
    %344 = vmatprep.subr.mxu0 0.0
    %345 = vmatpush1.msra.mxu0 %v304
    %346 = vmatprep.subr.mxu0 0.0
    %347 = vmatpush1.msra.mxu0 %v305
    %348 = vmatprep.subr.mxu0 0.0
    %349 = vmatpush1.msra.mxu0 %v306
    %350 = vmatprep.subr.mxu0 0.0
    %351 = vmatpush1.msra.mxu0 %v307
    %352 = vmatprep.subr.mxu0 0.0
    %353 = vmatpush1.msra.mxu0 %v308
    %354 = vmatprep.subr.mxu0 0.0
    %355 = vmatpush1.msra.mxu0 %v309
    %356 = vmatprep.subr.mxu0 0.0
    %357 = vmatpush1.msra.mxu0 %v310
    %358 = vmatprep.subr.mxu0 0.0
    %359 = vmatpush1.msra.mxu0 %v311
    %360 = vmatprep.subr.mxu0 0.0
    %361 = vmatpush1.msra.mxu0 %v312
    %362 = vmatprep.subr.mxu0 0.0
    %363 = vmatpush1.msra.mxu0 %v313
    %364 = vmatprep.subr.mxu0 0.0
    %365 = vmatpush1.msra.mxu0 %v314
    %366 = vmatprep.subr.mxu0 0.0
    %367 = vmatpush1.msra.mxu0 %v315
    %368 = vmatprep.subr.mxu0 0.0
    %369 = vmatpush1.msra.mxu0 %v316
    %370 = vmatprep.subr.mxu0 0.0
    %371 = vmatpush1.msra.mxu0 %v317
    %372 = vmatprep.subr.mxu0 0.0
    %373 = vmatpush1.msra.mxu0 %v318
    %374 = vmatprep.subr.mxu0 0.0
    %375 = vmatpush1.msra.mxu0 %v319
    %376 = vmatprep.subr.mxu0 0.0
    %377 = vmatpush1.msra.mxu0 %v320
    %378 = vmatprep.subr.mxu0 0.0
    %379 = vmatpush1.msra.mxu0 %v321
    %380 = vmatprep.subr.mxu0 0.0
    %381 = vmatpush1.msra.mxu0 %v322
    %382 = vmatprep.subr.mxu0 0.0
    %383 = vmatpush1.msra.mxu0 %v323
    %384 = vmatprep.subr.mxu0 0.0
    %385 = vmatpush1.msra.mxu0 %v324
    %386 = vmatprep.subr.mxu0 0.0
    %387 = vmatpush1.msra.mxu0 %v325
    %388 = vmatprep.subr.mxu0 0.0
    %389 = vmatpush1.msra.mxu0 %v326
    %390 = vmatprep.subr.mxu0 0.0
    %391 = vmatpush1.msra.mxu0 %v327
    %392 = vmatprep.subr.mxu0 0.0
    %393 = vmatpush1.msra.mxu0 %v328
    %394 = vmatprep.subr.mxu0 0.0
    %395 = vmatpush1.msra.mxu0 %v329
    %396 = vmatprep.subr.mxu0 0.0
    %397 = vmatpush1.msra.mxu0 %v330
    %398 = vmatprep.subr.mxu0 0.0
    %399 = vmatpush1.msra.mxu0 %v331
    %400 = vmatprep.subr.mxu0 0.0
    %401 = vmatpush1.msra.mxu0 %v332
    %402 = vmatprep.subr.mxu0 0.0
    %403 = vmatpush1.msra.mxu0 %v333
    %404 = vmatprep.subr.mxu0 0.0
    %405 = vmatpush1.msra.mxu0 %v334
    %406 = vmatprep.mubr.f32.mxu0 %v302
    %407 = vmatmul.mubr.f32.gmra.mrb[0].mxu0 %v300
    %v408 = vpop.f32.mrb[0].mxu0
    %v409 = vadd.f32 %v340, %v408
    %v410 = vpop.f32.mrb[0].mxu0
    %411 = vdwg.mxu0
    %412 = vst [vmem:[#allocation10] sm:$0xff] %v409
    // Predicated region
    $region46: #{linear_classifier_forward.1} parent=1 // pred_check
      _
    $region47: #{linear_classifier_forward.1} parent=1 // pred_check_branch
      %414 = sbr.rel (0) target = $region49
    $region48: #{linear_classifier_forward.1} parent=1 // pred_region
      %s416 = ssub.s32 128, 128
      %417 = vsyncadd [#allocation4], %s416
      %s419 = sshll.u32 [#allocation10], 4
      %s420 = int_to_ptr.vmem [resolvable:$true] %s419
      %422 = dma.vmem_to_hbm [thread:$0]  %s420, 128, %s7, [#allocation4]
    $region49: #{linear_classifier_forward.1} parent=1 // pred_fallthru
      _
    // Predicated region
    $region50: #{linear_classifier_forward.1} parent=1 // pred_check
      _
    $region51: #{linear_classifier_forward.1} parent=1 // pred_check_branch
      %424 = sbr.rel (0) target = $region53
    $region52: #{linear_classifier_forward.1} parent=1 // pred_region
      %425 = dma.done [#allocation4], 128
    $region53: #{linear_classifier_forward.1} parent=1 // pred_fallthru
      _
    %426 = vsyncpa [#allocation3], 1
    %427 = vsyncpa [#allocation6], 1
    %428 = vsyncpa [#allocation9], 1
    %429 = vsyncpa [#allocation4], 1

</llo_original>
